<compile_context>
chip_gen: v7x
topology: tpu7x:2x2x1
jax: 0.10.0
libtpu: 0.0.40
codegen_flags: <defaults>
</compile_context>

<pallas_src>
import functools

import jax
import jax.numpy as jnp
from jax import lax
from jax.experimental import pallas as pl
from jax.experimental.pallas import tpu as pltpu


_PAD_MODE = {
    "replicate": "edge",
    "reflect": "reflect",
    "zero": "constant",
    "constant": "constant",
    "periodic": "wrap",
}


def _get_pad(data_len, filt_len):
    # Mirrors the PyTorch _get_pad: returns (pad_hi, pad_lo).
    padr = (2 * filt_len - 3) // 2
    padl = (2 * filt_len - 3) // 2
    if data_len % 2 != 0:
        padr += 1
    return padr, padl


def _filter_matrix(dec_lo, dec_hi):
    """(4, flen*flen) flattened ll/lh/hl/hh 2-D filters (same order as torch)."""
    lo = dec_lo.reshape(-1).astype(jnp.float32)
    hi = dec_hi.reshape(-1).astype(jnp.float32)
    ll = jnp.outer(lo, lo)
    lh = jnp.outer(hi, lo)
    hl = jnp.outer(lo, hi)
    hh = jnp.outer(hi, hi)
    return jnp.stack([ll, lh, hl, hh], axis=0).reshape(4, -1)


# ----------------------------------------------------------------------------
# Pallas kernel: out[f] = sum_p w[f, p] * taps[p]   (pure VPU, lane-dense)
# ----------------------------------------------------------------------------
def _dwt_recombine_kernel(w_ref, taps_ref, out_ref, *, num_taps):
    # w_ref:    SMEM (4, num_taps) f32  -- flattened ll/lh/hl/hh filters
    # taps_ref: VMEM (num_taps, TM, L) f32 -- stride-2 polyphase taps
    # out_ref:  VMEM (4, TM, L) f32 -- ll, lh, hl, hh sub-bands
    taps = [taps_ref[p] for p in range(num_taps)]
    for f in range(4):
        acc = taps[0] * w_ref[f, 0]
        for p in range(1, num_taps):
            acc = acc + taps[p] * w_ref[f, p]
        out_ref[f] = acc


def _choose_layout(n, num_taps):
    """Pick (lane_width, rows_per_block, padded_rows) for the flattened layout."""
    lane = 512
    while lane > 128 and n < lane:
        lane //= 2
    if n < lane:                       # tiny problem: one (possibly partial) block
        lane = max(n, 1)
    m = -(-n // lane)                  # rows of the (m, lane) layout
    # Cap rows per block so one input block stays around <= 2 MiB (VMEM headroom
    # on v7x even with double buffering and larger filter supports).
    max_tm = max(8, (2 * 1024 * 1024) // (num_taps * lane * 4))
    max_tm = (max_tm // 8) * 8
    if m >= 8:
        tm = min(256, max_tm, (m // 8) * 8)
    else:
        tm = m                         # equals full dim -> allowed block shape
    m_pad = -(-m // tm) * tm
    return lane, tm, m_pad


# ----------------------------------------------------------------------------
# One DWT level: pad -> polyphase taps -> Pallas recombination -> sub-bands
# ----------------------------------------------------------------------------
def _dwt_single_level(x, w2d, flen, mode):
    B, C, H, W = x.shape
    padb, padt = _get_pad(H, flen)
    padr, padl = _get_pad(W, flen)
    if padb or padt or padr or padl:
        x = jnp.pad(x, ((0, 0), (0, 0), (padt, padb), (padl, padr)),
                    mode=_PAD_MODE[mode])
    hp, wp = H + padt + padb, W + padl + padr
    h = (hp - flen) // 2 + 1
    w = (wp - flen) // 2 + 1
    num_taps = flen * flen

    # Stride-2 polyphase taps: taps[a*flen+b][..., i, j] = x_pad[..., 2i+a, 2j+b]
    taps = [x[:, :, a::2, b::2][:, :, :h, :w]
            for a in range(flen) for b in range(flen)]
    n = B * C * h * w
    taps = jnp.stack(taps, axis=0).reshape(num_taps, n)

    lane, tm, m_pad = _choose_layout(n, num_taps)
    pad = m_pad * lane - n
    if pad:
        taps = jnp.pad(taps, ((0, 0), (0, pad)))
    taps = taps.reshape(num_taps, m_pad, lane)

    out = pl.pallas_call(
        functools.partial(_dwt_recombine_kernel, num_taps=num_taps),
        out_shape=jax.ShapeDtypeStruct((4, m_pad, lane), jnp.float32),
        grid=(m_pad // tm,),
        in_specs=[
            pl.BlockSpec(memory_space=pltpu.MemorySpace.SMEM),        # filter weights
            pl.BlockSpec((num_taps, tm, lane), lambda i: (0, i, 0)),  # taps
        ],
        out_specs=pl.BlockSpec((4, tm, lane), lambda i: (0, i, 0)),
        compiler_params=pltpu.CompilerParams(
            dimension_semantics=("parallel",)),
    )(w2d, taps)

    out = out.reshape(4, m_pad * lane)[:, :n].reshape(4, B, C, h, w)
    return out[0], out[1], out[2], out[3]


def dwt_forward(x, dec_lo, dec_hi, level=1, mode="replicate"):
    """Matches DWT.forward: [ll_L, (lh_L, hl_L, hh_L), ..., (lh_1, hl_1, hh_1)]."""
    # TODO(synk): string wavelet names (pywt.Wavelet lookup) are host-side only;
    # decomposition filters must be passed in as arrays (as mlwnet does).
    flen = dec_lo.reshape(-1).shape[0]
    w2d = _filter_matrix(dec_lo, dec_hi)
    l = x.astype(jnp.float32)
    comps = []
    for _ in range(level):
        l, lh, hl, hh = _dwt_single_level(l, w2d, flen, mode)
        comps.append((lh, hl, hh))
    comps.append(l)
    return comps[::-1]


# ----------------------------------------------------------------------------
# Pure-JAX reference (mirrors the PyTorch forward) for validation
# ----------------------------------------------------------------------------
def reference_forward(x, dec_lo, dec_hi, level=1, mode="replicate"):
    lo = dec_lo.reshape(-1).astype(jnp.float32)
    hi = dec_hi.reshape(-1).astype(jnp.float32)
    flen = lo.shape[0]
    filt = jnp.stack([jnp.outer(lo, lo), jnp.outer(hi, lo),
                      jnp.outer(lo, hi), jnp.outer(hi, hi)], axis=0)  # (4,flen,flen)
    l = x.astype(jnp.float32)
    comps = []
    for _ in range(level):
        b, c, hcur, wcur = l.shape
        padb, padt = _get_pad(hcur, flen)
        padr, padl = _get_pad(wcur, flen)
        lp = jnp.pad(l, ((0, 0), (0, 0), (padt, padb), (padl, padr)),
                     mode=_PAD_MODE[mode])
        k = jnp.tile(filt, (c, 1, 1))[:, None, :, :]                  # (4c,1,flen,flen)
        y = lax.conv_general_dilated(lp, k, (2, 2), "VALID",
                                     feature_group_count=c,
                                     dimension_numbers=("NCHW", "OIHW", "NCHW"),
                                     precision=lax.Precision.HIGHEST)
        y = y.reshape(b, c, 4, y.shape[-2], y.shape[-1])
        l = y[:, :, 0]
        comps.append((y[:, :, 1], y[:, :, 2], y[:, :, 3]))
    comps.append(l)
    return comps[::-1]


# ----------------------------------------------------------------------------
if __name__ == "__main__":
    B, C, H, W = 2, 4, 16, 16
    key = jax.random.PRNGKey(0)
    k1, k2, k3 = jax.random.split(key, 3)

    x = jax.random.normal(k1, (B, C, H, W), jnp.float32)
    # Haar decomposition filters (as the learnable parameters in mlwnet),
    # slightly perturbed so the test does not rely on Haar-specific identities.
    s = 0.7071067811865476
    dec_lo = jnp.array([s, s], jnp.float32) + 0.01 * jax.random.normal(k2, (2,), jnp.float32)
    dec_hi = jnp.array([-s, s], jnp.float32) + 0.01 * jax.random.normal(k3, (2,), jnp.float32)

    fwd = jax.jit(functools.partial(dwt_forward, level=1, mode="replicate"))
    out = jax.block_until_ready(fwd(x, dec_lo, dec_hi))

    ll = out[0]
    lh, hl, hh = out[1]
    assert ll.shape == (B, C, H // 2, W // 2) and ll.dtype == jnp.float32
    assert lh.shape == hl.shape == hh.shape == (B, C, H // 2, W // 2)

    ref = reference_forward(x, dec_lo, dec_hi, level=1, mode="replicate")
    out_leaves = jax.tree_util.tree_leaves(out)
    ref_leaves = jax.tree_util.tree_leaves(ref)
    err = max(float(jnp.max(jnp.abs(a - b))) for a, b in zip(out_leaves, ref_leaves))
    if not (err < 1e-4):
        raise AssertionError(f"mismatch vs reference: max abs err = {err}")

    print("KERNEL_OK")
</pallas_src>

<mosaic_0001>
module attributes {stable_mosaic.version = 11 : i64} {
  func.func @_dwt_recombine_kernel(%arg0: i32, %arg1: memref<4x4xf32, #tpu.memory_space<smem>>, %arg2: memref<4x1x512xf32, #tpu.memory_space<vmem>>, %arg3: memref<4x1x512xf32, #tpu.memory_space<vmem>>) attributes {dimension_semantics = [#tpu.dimension_semantics<parallel>], iteration_bounds = array<i64: 1>, scalar_prefetch = 0 : i64, scratch_operands = 0 : i64, tpu.core_type = #tpu.core_type<tc>, window_params = [{transform_indices = @transform_0, window_bounds = array<i64: 4, 4>}, {transform_indices = @transform_1, window_bounds = array<i64: 4, 1, 512>}, {transform_indices = @transform_2, window_bounds = array<i64: 4, 1, 512>}]} {
    %c0 = arith.constant 0 : index
    %c0_0 = arith.constant 0 : index
    %c0_1 = arith.constant 0 : index
    %0 = vector.load %arg2[%c0, %c0_0, %c0_1] : memref<4x1x512xf32, #tpu.memory_space<vmem>>, vector<1x1x512xf32>
    %1 = vector.shape_cast %0 : vector<1x1x512xf32> to vector<1x512xf32>
    %c1 = arith.constant 1 : index
    %c0_2 = arith.constant 0 : index
    %c0_3 = arith.constant 0 : index
    %2 = vector.load %arg2[%c1, %c0_2, %c0_3] : memref<4x1x512xf32, #tpu.memory_space<vmem>>, vector<1x1x512xf32>
    %3 = vector.shape_cast %2 : vector<1x1x512xf32> to vector<1x512xf32>
    %c2 = arith.constant 2 : index
    %c0_4 = arith.constant 0 : index
    %c0_5 = arith.constant 0 : index
    %4 = vector.load %arg2[%c2, %c0_4, %c0_5] : memref<4x1x512xf32, #tpu.memory_space<vmem>>, vector<1x1x512xf32>
    %5 = vector.shape_cast %4 : vector<1x1x512xf32> to vector<1x512xf32>
    %c3 = arith.constant 3 : index
    %c0_6 = arith.constant 0 : index
    %c0_7 = arith.constant 0 : index
    %6 = vector.load %arg2[%c3, %c0_6, %c0_7] : memref<4x1x512xf32, #tpu.memory_space<vmem>>, vector<1x1x512xf32>
    %7 = vector.shape_cast %6 : vector<1x1x512xf32> to vector<1x512xf32>
    %c0_8 = arith.constant 0 : index
    %c0_9 = arith.constant 0 : index
    %8 = memref.load %arg1[%c0_8, %c0_9] : memref<4x4xf32, #tpu.memory_space<smem>>
    %9 = vector.broadcast %8 : f32 to vector<1x512xf32>
    %10 = arith.mulf %1, %9 : vector<1x512xf32>
    %c0_10 = arith.constant 0 : index
    %c1_11 = arith.constant 1 : index
    %11 = memref.load %arg1[%c0_10, %c1_11] : memref<4x4xf32, #tpu.memory_space<smem>>
    %12 = vector.broadcast %11 : f32 to vector<1x512xf32>
    %13 = arith.mulf %3, %12 : vector<1x512xf32>
    %14 = arith.addf %10, %13 : vector<1x512xf32>
    %c0_12 = arith.constant 0 : index
    %c2_13 = arith.constant 2 : index
    %15 = memref.load %arg1[%c0_12, %c2_13] : memref<4x4xf32, #tpu.memory_space<smem>>
    %16 = vector.broadcast %15 : f32 to vector<1x512xf32>
    %17 = arith.mulf %5, %16 : vector<1x512xf32>
    %18 = arith.addf %14, %17 : vector<1x512xf32>
    %c0_14 = arith.constant 0 : index
    %c3_15 = arith.constant 3 : index
    %19 = memref.load %arg1[%c0_14, %c3_15] : memref<4x4xf32, #tpu.memory_space<smem>>
    %20 = vector.broadcast %19 : f32 to vector<1x512xf32>
    %21 = arith.mulf %7, %20 : vector<1x512xf32>
    %22 = arith.addf %18, %21 : vector<1x512xf32>
    %c0_16 = arith.constant 0 : index
    %c0_17 = arith.constant 0 : index
    %c0_18 = arith.constant 0 : index
    %23 = vector.load %arg3[%c0_16, %c0_17, %c0_18] : memref<4x1x512xf32, #tpu.memory_space<vmem>>, vector<1x1x512xf32>
    %24 = vector.shape_cast %23 : vector<1x1x512xf32> to vector<1x512xf32>
    %25 = vector.shape_cast %22 : vector<1x512xf32> to vector<1x1x512xf32>
    tpu.vector_store %arg3[%c0_16, %c0_17, %c0_18], %25 {strides = array<i32>} : memref<4x1x512xf32, #tpu.memory_space<vmem>>, vector<1x1x512xf32>,
    %c1_19 = arith.constant 1 : index
    %c0_20 = arith.constant 0 : index
    %26 = memref.load %arg1[%c1_19, %c0_20] : memref<4x4xf32, #tpu.memory_space<smem>>
    %27 = vector.broadcast %26 : f32 to vector<1x512xf32>
    %28 = arith.mulf %1, %27 : vector<1x512xf32>
    %c1_21 = arith.constant 1 : index
    %c1_22 = arith.constant 1 : index
    %29 = memref.load %arg1[%c1_21, %c1_22] : memref<4x4xf32, #tpu.memory_space<smem>>
    %30 = vector.broadcast %29 : f32 to vector<1x512xf32>
    %31 = arith.mulf %3, %30 : vector<1x512xf32>
    %32 = arith.addf %28, %31 : vector<1x512xf32>
    %c1_23 = arith.constant 1 : index
    %c2_24 = arith.constant 2 : index
    %33 = memref.load %arg1[%c1_23, %c2_24] : memref<4x4xf32, #tpu.memory_space<smem>>
    %34 = vector.broadcast %33 : f32 to vector<1x512xf32>
    %35 = arith.mulf %5, %34 : vector<1x512xf32>
    %36 = arith.addf %32, %35 : vector<1x512xf32>
    %c1_25 = arith.constant 1 : index
    %c3_26 = arith.constant 3 : index
    %37 = memref.load %arg1[%c1_25, %c3_26] : memref<4x4xf32, #tpu.memory_space<smem>>
    %38 = vector.broadcast %37 : f32 to vector<1x512xf32>
    %39 = arith.mulf %7, %38 : vector<1x512xf32>
    %40 = arith.addf %36, %39 : vector<1x512xf32>
    %c1_27 = arith.constant 1 : index
    %c0_28 = arith.constant 0 : index
    %c0_29 = arith.constant 0 : index
    %41 = vector.load %arg3[%c1_27, %c0_28, %c0_29] : memref<4x1x512xf32, #tpu.memory_space<vmem>>, vector<1x1x512xf32>
    %42 = vector.shape_cast %41 : vector<1x1x512xf32> to vector<1x512xf32>
    %43 = vector.shape_cast %40 : vector<1x512xf32> to vector<1x1x512xf32>
    tpu.vector_store %arg3[%c1_27, %c0_28, %c0_29], %43 {strides = array<i32>} : memref<4x1x512xf32, #tpu.memory_space<vmem>>, vector<1x1x512xf32>,
    %c2_30 = arith.constant 2 : index
    %c0_31 = arith.constant 0 : index
    %44 = memref.load %arg1[%c2_30, %c0_31] : memref<4x4xf32, #tpu.memory_space<smem>>
    %45 = vector.broadcast %44 : f32 to vector<1x512xf32>
    %46 = arith.mulf %1, %45 : vector<1x512xf32>
    %c2_32 = arith.constant 2 : index
    %c1_33 = arith.constant 1 : index
    %47 = memref.load %arg1[%c2_32, %c1_33] : memref<4x4xf32, #tpu.memory_space<smem>>
    %48 = vector.broadcast %47 : f32 to vector<1x512xf32>
    %49 = arith.mulf %3, %48 : vector<1x512xf32>
    %50 = arith.addf %46, %49 : vector<1x512xf32>
    %c2_34 = arith.constant 2 : index
    %c2_35 = arith.constant 2 : index
    %51 = memref.load %arg1[%c2_34, %c2_35] : memref<4x4xf32, #tpu.memory_space<smem>>
    %52 = vector.broadcast %51 : f32 to vector<1x512xf32>
    %53 = arith.mulf %5, %52 : vector<1x512xf32>
    %54 = arith.addf %50, %53 : vector<1x512xf32>
    %c2_36 = arith.constant 2 : index
    %c3_37 = arith.constant 3 : index
    %55 = memref.load %arg1[%c2_36, %c3_37] : memref<4x4xf32, #tpu.memory_space<smem>>
    %56 = vector.broadcast %55 : f32 to vector<1x512xf32>
    %57 = arith.mulf %7, %56 : vector<1x512xf32>
    %58 = arith.addf %54, %57 : vector<1x512xf32>
    %c2_38 = arith.constant 2 : index
    %c0_39 = arith.constant 0 : index
    %c0_40 = arith.constant 0 : index
    %59 = vector.load %arg3[%c2_38, %c0_39, %c0_40] : memref<4x1x512xf32, #tpu.memory_space<vmem>>, vector<1x1x512xf32>
    %60 = vector.shape_cast %59 : vector<1x1x512xf32> to vector<1x512xf32>
    %61 = vector.shape_cast %58 : vector<1x512xf32> to vector<1x1x512xf32>
    tpu.vector_store %arg3[%c2_38, %c0_39, %c0_40], %61 {strides = array<i32>} : memref<4x1x512xf32, #tpu.memory_space<vmem>>, vector<1x1x512xf32>,
    %c3_41 = arith.constant 3 : index
    %c0_42 = arith.constant 0 : index
    %62 = memref.load %arg1[%c3_41, %c0_42] : memref<4x4xf32, #tpu.memory_space<smem>>
    %63 = vector.broadcast %62 : f32 to vector<1x512xf32>
    %64 = arith.mulf %1, %63 : vector<1x512xf32>
    %c3_43 = arith.constant 3 : index
    %c1_44 = arith.constant 1 : index
    %65 = memref.load %arg1[%c3_43, %c1_44] : memref<4x4xf32, #tpu.memory_space<smem>>
    %66 = vector.broadcast %65 : f32 to vector<1x512xf32>
    %67 = arith.mulf %3, %66 : vector<1x512xf32>
    %68 = arith.addf %64, %67 : vector<1x512xf32>
    %c3_45 = arith.constant 3 : index
    %c2_46 = arith.constant 2 : index
    %69 = memref.load %arg1[%c3_45, %c2_46] : memref<4x4xf32, #tpu.memory_space<smem>>
    %70 = vector.broadcast %69 : f32 to vector<1x512xf32>
    %71 = arith.mulf %5, %70 : vector<1x512xf32>
    %72 = arith.addf %68, %71 : vector<1x512xf32>
    %c3_47 = arith.constant 3 : index
    %c3_48 = arith.constant 3 : index
    %73 = memref.load %arg1[%c3_47, %c3_48] : memref<4x4xf32, #tpu.memory_space<smem>>
    %74 = vector.broadcast %73 : f32 to vector<1x512xf32>
    %75 = arith.mulf %7, %74 : vector<1x512xf32>
    %76 = arith.addf %72, %75 : vector<1x512xf32>
    %c3_49 = arith.constant 3 : index
    %c0_50 = arith.constant 0 : index
    %c0_51 = arith.constant 0 : index
    %77 = vector.load %arg3[%c3_49, %c0_50, %c0_51] : memref<4x1x512xf32, #tpu.memory_space<vmem>>, vector<1x1x512xf32>
    %78 = vector.shape_cast %77 : vector<1x1x512xf32> to vector<1x512xf32>
    %79 = vector.shape_cast %76 : vector<1x512xf32> to vector<1x1x512xf32>
    tpu.vector_store %arg3[%c3_49, %c0_50, %c0_51], %79 {strides = array<i32>} : memref<4x1x512xf32, #tpu.memory_space<vmem>>, vector<1x1x512xf32>,
    return
  }
  func.func @transform_0(%arg0: i32) -> (i32, i32) {
    %c0_i32 = arith.constant 0 : i32
    %c0_i32_0 = arith.constant 0 : i32
    %c0_i32_1 = arith.constant 0 : i32
    return %c0_i32, %c0_i32_0 : i32, i32
  }
  func.func @transform_1(%arg0: i32) -> (i32, i32, i32) {
    %c0_i32 = arith.constant 0 : i32
    %c0_i32_0 = arith.constant 0 : i32
    %c0_i32_1 = arith.constant 0 : i32
    return %c0_i32, %arg0, %c0_i32_0 : i32, i32, i32
  }
  func.func @transform_2(%arg0: i32) -> (i32, i32, i32) {
    %c0_i32 = arith.constant 0 : i32
    %c0_i32_0 = arith.constant 0 : i32
    %c0_i32_1 = arith.constant 0 : i32
    return %c0_i32, %arg0, %c0_i32_0 : i32, i32, i32
  }
}

</mosaic_0001>

<llo_original>
// kernel: squeeze.4
$region0: #{squeeze.4}
  %s0 = inlined_call_operand.vmem [shape: f32[512], index: 0, kind: input, shape index: {}]
  %s1 = inlined_call_operand.hbm [shape: f32[2,4,8,8], index: 1, kind: output, shape index: {}]
  $region1: #{squeeze.4} parent=0
    #allocation0 [shape = 'u8[32768]{0}', space=vmem, size = 0x8000, scoped, tag = 'operand span for operand 1']
    #allocation1 [shape = 's32[1]{0}', space=sflag, size = 0x4, scoped, tag = 'scoped memory for squeeze.4']
    #allocation2 [shape = 'u8[4096]{0}', space=vmem, size = 0x1000, scoped, tag = 'scoped mem for input reshape']
    %2 = vsyncpa [#allocation1], 0
    %s4 = sshllo.u32 0, 4
    %v5 = vld [vmem:[%s0] sm:%s4]
    %6 = vst [vmem:[#allocation2] sm:%s4] %v5
    %v7 = vld [vmem:[#allocation2] sm:$0xf]
    %vm8 = vcmask 64512
    %9 = vst.msk [vmem:[#allocation0] ss:$16 sm:$0x3] %vm8, %v7
    %10 = vst.msk [vmem:[#allocation0] ss:$16 sm:$0xc] %vm8, %v7
    %v11 = vld [vmem:[#allocation2] sm:$0xf]
    %12 = vrot.lane.b32.xlu0 %v11, 120
    %v13 = vpop.permute.xlu0 %12
    %vm14 = vcmask 64512
    %s15 = scalar_lea.vmem [#allocation0], 1
    %16 = vst.msk [vmem:[%s15] ss:$16 sm:$0x3] %vm14, %v13
    %s17 = scalar_lea.vmem [#allocation0], 1
    %18 = vst.msk [vmem:[%s17] ss:$16 sm:$0xc] %vm14, %v13
    %v19 = vld [vmem:[#allocation2] sm:$0xf]
    %20 = vrot.lane.b32.xlu0 %v19, 112
    %v21 = vpop.permute.xlu0 %20
    %vm22 = vcmask 64512
    %s23 = scalar_lea.vmem [#allocation0], 2
    %24 = vst.msk [vmem:[%s23] ss:$16 sm:$0x3] %vm22, %v21
    %s25 = scalar_lea.vmem [#allocation0], 2
    %26 = vst.msk [vmem:[%s25] ss:$16 sm:$0xc] %vm22, %v21
    %v27 = vld [vmem:[#allocation2] sm:$0xf]
    %28 = vrot.lane.b32.xlu0 %v27, 104
    %v29 = vpop.permute.xlu0 %28
    %vm30 = vcmask 64512
    %s31 = scalar_lea.vmem [#allocation0], 3
    %32 = vst.msk [vmem:[%s31] ss:$16 sm:$0x3] %vm30, %v29
    %s33 = scalar_lea.vmem [#allocation0], 3
    %34 = vst.msk [vmem:[%s33] ss:$16 sm:$0xc] %vm30, %v29
    %v35 = vld [vmem:[#allocation2] sm:$0xf]
    %36 = vrot.lane.b32.xlu0 %v35, 96
    %v37 = vpop.permute.xlu0 %36
    %vm38 = vcmask 64512
    %s39 = scalar_lea.vmem [#allocation0], 4
    %40 = vst.msk [vmem:[%s39] ss:$16 sm:$0x3] %vm38, %v37
    %s41 = scalar_lea.vmem [#allocation0], 4
    %42 = vst.msk [vmem:[%s41] ss:$16 sm:$0xc] %vm38, %v37
    %v43 = vld [vmem:[#allocation2] sm:$0xf]
    %44 = vrot.lane.b32.xlu0 %v43, 88
    %v45 = vpop.permute.xlu0 %44
    %vm46 = vcmask 64512
    %s47 = scalar_lea.vmem [#allocation0], 5
    %48 = vst.msk [vmem:[%s47] ss:$16 sm:$0x3] %vm46, %v45
    %s49 = scalar_lea.vmem [#allocation0], 5
    %50 = vst.msk [vmem:[%s49] ss:$16 sm:$0xc] %vm46, %v45
    %v51 = vld [vmem:[#allocation2] sm:$0xf]
    %52 = vrot.lane.b32.xlu0 %v51, 80
    %v53 = vpop.permute.xlu0 %52
    %vm54 = vcmask 64512
    %s55 = scalar_lea.vmem [#allocation0], 6
    %56 = vst.msk [vmem:[%s55] ss:$16 sm:$0x3] %vm54, %v53
    %s57 = scalar_lea.vmem [#allocation0], 6
    %58 = vst.msk [vmem:[%s57] ss:$16 sm:$0xc] %vm54, %v53
    %v59 = vld [vmem:[#allocation2] sm:$0xf]
    %60 = vrot.lane.b32.xlu0 %v59, 72
    %v61 = vpop.permute.xlu0 %60
    %vm62 = vcmask 64512
    %s63 = scalar_lea.vmem [#allocation0], 7
    %64 = vst.msk [vmem:[%s63] ss:$16 sm:$0x3] %vm62, %v61
    %s65 = scalar_lea.vmem [#allocation0], 7
    %66 = vst.msk [vmem:[%s65] ss:$16 sm:$0xc] %vm62, %v61
    %v67 = vld [vmem:[#allocation2] sm:$0xf]
    %68 = vrot.lane.b32.xlu0 %v67, 64
    %v69 = vpop.permute.xlu0 %68
    %vm70 = vcmask 64512
    %s71 = scalar_lea.vmem [#allocation0], 8
    %72 = vst.msk [vmem:[%s71] ss:$16 sm:$0x3] %vm70, %v69
    %s73 = scalar_lea.vmem [#allocation0], 8
    %74 = vst.msk [vmem:[%s73] ss:$16 sm:$0xc] %vm70, %v69
    %v75 = vld [vmem:[#allocation2] sm:$0xf]
    %76 = vrot.lane.b32.xlu0 %v75, 56
    %v77 = vpop.permute.xlu0 %76
    %vm78 = vcmask 64512
    %s79 = scalar_lea.vmem [#allocation0], 9
    %80 = vst.msk [vmem:[%s79] ss:$16 sm:$0x3] %vm78, %v77
    %s81 = scalar_lea.vmem [#allocation0], 9
    %82 = vst.msk [vmem:[%s81] ss:$16 sm:$0xc] %vm78, %v77
    %v83 = vld [vmem:[#allocation2] sm:$0xf]
    %84 = vrot.lane.b32.xlu0 %v83, 48
    %v85 = vpop.permute.xlu0 %84
    %vm86 = vcmask 64512
    %s87 = scalar_lea.vmem [#allocation0], 10
    %88 = vst.msk [vmem:[%s87] ss:$16 sm:$0x3] %vm86, %v85
    %s89 = scalar_lea.vmem [#allocation0], 10
    %90 = vst.msk [vmem:[%s89] ss:$16 sm:$0xc] %vm86, %v85
    %v91 = vld [vmem:[#allocation2] sm:$0xf]
    %92 = vrot.lane.b32.xlu0 %v91, 40
    %v93 = vpop.permute.xlu0 %92
    %vm94 = vcmask 64512
    %s95 = scalar_lea.vmem [#allocation0], 11
    %96 = vst.msk [vmem:[%s95] ss:$16 sm:$0x3] %vm94, %v93
    %s97 = scalar_lea.vmem [#allocation0], 11
    %98 = vst.msk [vmem:[%s97] ss:$16 sm:$0xc] %vm94, %v93
    %v99 = vld [vmem:[#allocation2] sm:$0xf]
    %100 = vrot.lane.b32.xlu0 %v99, 32
    %v101 = vpop.permute.xlu0 %100
    %vm102 = vcmask 64512
    %s103 = scalar_lea.vmem [#allocation0], 12
    %104 = vst.msk [vmem:[%s103] ss:$16 sm:$0x3] %vm102, %v101
    %s105 = scalar_lea.vmem [#allocation0], 12
    %106 = vst.msk [vmem:[%s105] ss:$16 sm:$0xc] %vm102, %v101
    %v107 = vld [vmem:[#allocation2] sm:$0xf]
    %108 = vrot.lane.b32.xlu0 %v107, 24
    %v109 = vpop.permute.xlu0 %108
    %vm110 = vcmask 64512
    %s111 = scalar_lea.vmem [#allocation0], 13
    %112 = vst.msk [vmem:[%s111] ss:$16 sm:$0x3] %vm110, %v109
    %s113 = scalar_lea.vmem [#allocation0], 13
    %114 = vst.msk [vmem:[%s113] ss:$16 sm:$0xc] %vm110, %v109
    %v115 = vld [vmem:[#allocation2] sm:$0xf]
    %116 = vrot.lane.b32.xlu0 %v115, 16
    %v117 = vpop.permute.xlu0 %116
    %vm118 = vcmask 64512
    %s119 = scalar_lea.vmem [#allocation0], 14
    %120 = vst.msk [vmem:[%s119] ss:$16 sm:$0x3] %vm118, %v117
    %s121 = scalar_lea.vmem [#allocation0], 14
    %122 = vst.msk [vmem:[%s121] ss:$16 sm:$0xc] %vm118, %v117
    %v123 = vld [vmem:[#allocation2] sm:$0xf]
    %124 = vrot.lane.b32.xlu0 %v123, 8
    %v125 = vpop.permute.xlu0 %124
    %vm126 = vcmask 64512
    %s127 = scalar_lea.vmem [#allocation0], 15
    %128 = vst.msk [vmem:[%s127] ss:$16 sm:$0x3] %vm126, %v125
    %s129 = scalar_lea.vmem [#allocation0], 15
    %130 = vst.msk [vmem:[%s129] ss:$16 sm:$0xc] %vm126, %v125
    %s132 = ssub.s32 1024, 1024
    %133 = vsyncadd [#allocation1], %s132
    %s135 = sshll.u32 [#allocation0], 4
    %s136 = int_to_ptr.vmem [resolvable:$true] %s135
    %138 = dma.vmem_to_hbm [thread:$0]  %s136, 1024, %s1, [#allocation1]
    %139 = dma.done [#allocation1], 1024
    %140 = vsyncpa [#allocation1], 1

// kernel: dwt_forward.1
$region0: #{dwt_forward.1}
  #allocation0 [shape = 'u32[]', space=smem, size = 0x4, offset = 0x4, fixed_abs, tag = 'smem constant byte address 0x4 - core index']
  #allocation1 [shape = 'u32[144,128]{1,0:T(1,128)}', space=vmem, size = 0x12000, scoped, tag = 'internal scratch']
  %s0 = inlined_call_operand.vmem [shape: f32[4,4], index: 0, kind: input, shape index: {}]
  %s1 = inlined_call_operand.vmem [shape: f32[4,1,512], index: 1, kind: input, shape index: {}]
  %s2 = inlined_call_operand.vmem [shape: f32[4,1,512], index: 2, kind: output, shape index: {}]
  %s3 = sld [smem:[#allocation0]]
  $region22: #{dwt_forward.1} parent=0
    _
  %s5 = ssub.s32 1, %s3
  %s6 = scalar_select 0, %s5, %s3
  $region1: #{dwt_forward.1} parent=0
    #allocation2 [shape = 'u8[2048]{0}', space=smem, size = 0x800, scoped, tag = 'input window, operand 0, single buffered']
    #allocation3 [shape = 's32[1]{0}', space=sflag, size = 0x4, scoped, tag = 'scoped memory for dwt_forward.1']
    %7 = vsyncpa [#allocation3], 0
    // Predicated region
    $region2: #{dwt_forward.1} parent=1 // pred_check
      _
    $region3: #{dwt_forward.1} parent=1 // pred_check_branch
      %9 = sbr.rel (0) target = $region5
    $region4: #{dwt_forward.1} parent=1 // pred_region
      %s11 = ssub.s32 64, 64
      %12 = vsyncadd [#allocation3], %s11
      %s14 = sshll.u32 %s0, 4
      %s15 = int_to_ptr.vmem [resolvable:$true] %s14
      %17 = dma.vmem_to_smem %s15, 64, [#allocation2], [#allocation3]
    $region5: #{dwt_forward.1} parent=1 // pred_fallthru
      _
    // Predicated region
    $region6: #{dwt_forward.1} parent=1 // pred_check
      _
    $region7: #{dwt_forward.1} parent=1 // pred_check_branch
      %19 = sbr.rel (0) target = $region9
    $region8: #{dwt_forward.1} parent=1 // pred_region
      _
    $region9: #{dwt_forward.1} parent=1 // pred_fallthru
      _
    // Predicated region
    $region10: #{dwt_forward.1} parent=1 // pred_check
      _
    $region11: #{dwt_forward.1} parent=1 // pred_check_branch
      %21 = sbr.rel (0) target = $region13
    $region12: #{dwt_forward.1} parent=1 // pred_region
      %22 = dma.done [#allocation3], 64
    $region13: #{dwt_forward.1} parent=1 // pred_fallthru
      _
    %23 = sfence
    %v24 = vld [vmem:[%s1] sm:$0xf]
    %s25 = scalar_lea.vmem %s1, 4
    %v26 = vld [vmem:[%s25] sm:$0xf]
    %s27 = scalar_lea.vmem %s1, 8
    %v28 = vld [vmem:[%s27] sm:$0xf]
    %s29 = scalar_lea.vmem %s1, 12
    %v30 = vld [vmem:[%s29] sm:$0xf]
    %s31 = sld [smem:[#allocation2]]
    %v32 = vstv %s31
    %v33 = vmul.f32 %v24, %v32
    %s34 = sld [smem:[#allocation2 + $0x1]]
    %v35 = vstv %s34
    %v36 = vmul.f32 %v26, %v35
    %v37 = vadd.f32 %v33, %v36
    %s38 = sld [smem:[#allocation2 + $0x2]]
    %v39 = vstv %s38
    %v40 = vmul.f32 %v28, %v39
    %v41 = vadd.f32 %v37, %v40
    %s42 = sld [smem:[#allocation2 + $0x3]]
    %v43 = vstv %s42
    %v44 = vmul.f32 %v30, %v43
    %v45 = vadd.f32 %v41, %v44
    %v46 = vlaneseq
    %vm47 = vcmp.ge.s32.totalorder %v46, 0
    %vm48 = vcmp.lt.s32.totalorder %v46, 512
    %vm49 = vmand %vm47, %vm48
    %50 = vst.msk [vmem:[%s2] sm:$0xf] %vm49, %v45
    %s51 = sld [smem:[#allocation2 + $0x80]]
    %v52 = vstv %s51
    %v53 = vmul.f32 %v24, %v52
    %s54 = sld [smem:[#allocation2 + $0x81]]
    %v55 = vstv %s54
    %v56 = vmul.f32 %v26, %v55
    %v57 = vadd.f32 %v53, %v56
    %s58 = sld [smem:[#allocation2 + $0x82]]
    %v59 = vstv %s58
    %v60 = vmul.f32 %v28, %v59
    %v61 = vadd.f32 %v57, %v60
    %s62 = sld [smem:[#allocation2 + $0x83]]
    %v63 = vstv %s62
    %v64 = vmul.f32 %v30, %v63
    %v65 = vadd.f32 %v61, %v64
    %s66 = scalar_lea.vmem %s2, 4
    %67 = vst.msk [vmem:[%s66] sm:$0xf] %vm49, %v65
    %s68 = sld [smem:[#allocation2 + $0x100]]
    %v69 = vstv %s68
    %v70 = vmul.f32 %v24, %v69
    %s71 = sld [smem:[#allocation2 + $0x101]]
    %v72 = vstv %s71
    %v73 = vmul.f32 %v26, %v72
    %v74 = vadd.f32 %v70, %v73
    %s75 = sld [smem:[#allocation2 + $0x102]]
    %v76 = vstv %s75
    %v77 = vmul.f32 %v28, %v76
    %v78 = vadd.f32 %v74, %v77
    %s79 = sld [smem:[#allocation2 + $0x103]]
    %v80 = vstv %s79
    %v81 = vmul.f32 %v30, %v80
    %v82 = vadd.f32 %v78, %v81
    %s83 = scalar_lea.vmem %s2, 8
    %84 = vst.msk [vmem:[%s83] sm:$0xf] %vm49, %v82
    %s85 = sld [smem:[#allocation2 + $0x180]]
    %v86 = vstv %s85
    %v87 = vmul.f32 %v24, %v86
    %s88 = sld [smem:[#allocation2 + $0x181]]
    %v89 = vstv %s88
    %v90 = vmul.f32 %v26, %v89
    %v91 = vadd.f32 %v87, %v90
    %s92 = sld [smem:[#allocation2 + $0x182]]
    %v93 = vstv %s92
    %v94 = vmul.f32 %v28, %v93
    %v95 = vadd.f32 %v91, %v94
    %s96 = sld [smem:[#allocation2 + $0x183]]
    %v97 = vstv %s96
    %v98 = vmul.f32 %v30, %v97
    %v99 = vadd.f32 %v95, %v98
    %s100 = scalar_lea.vmem %s2, 12
    %101 = vst.msk [vmem:[%s100] sm:$0xf] %vm49, %v99
    // Predicated region
    $region14: #{dwt_forward.1} parent=1 // pred_check
      _
    $region15: #{dwt_forward.1} parent=1 // pred_check_branch
      %103 = sbr.rel (0) target = $region17
    $region16: #{dwt_forward.1} parent=1 // pred_region
      _
    $region17: #{dwt_forward.1} parent=1 // pred_fallthru
      _
    // Predicated region
    $region18: #{dwt_forward.1} parent=1 // pred_check
      _
    $region19: #{dwt_forward.1} parent=1 // pred_check_branch
      %105 = sbr.rel (0) target = $region21
    $region20: #{dwt_forward.1} parent=1 // pred_region
      _
    $region21: #{dwt_forward.1} parent=1 // pred_fallthru
      _
    %106 = vsyncpa [#allocation3], 1

</llo_original>
